<compile_context>
chip_gen: v6e
topology: v6e:2x2x1
jax: 0.10.0
libtpu: 0.0.40
codegen_flags: <defaults>
</compile_context>

<pallas_src>
import functools

import jax
import jax.numpy as jnp
from jax.experimental import pallas as pl
from jax.experimental.pallas import tpu as pltpu


# ---------------------------------------------------------------------------
# Hardware-aware tiling helpers
# ---------------------------------------------------------------------------
def _tpu_vmem_capacity_bytes():
    """Physical VMEM per TensorCore; conservative fallback if query fails."""
    try:
        return int(pltpu.get_tpu_info().vmem_capacity_bytes)
    except Exception:
        return 64 << 20  # v7x per-TC figure: safe lower bound for all gens


def _pick_batch_tile(batch, in_dim, vmem_cap):
    """Rows per x tile.

    One x tile is double-buffered by the auto-pipeline, so a single tile is
    capped at min(VMEM/4, 24 MiB) (keeps v7x total well under its 64 MiB,
    while v5e/v6e get large tiles to amortize the ~0.35 us per-step overhead).
    Rounded to a multiple of 256 rows for (8,128) alignment.
    """
    x_tile_budget = min(vmem_cap // 4, 24 << 20)
    rows = x_tile_budget // (in_dim * 4)
    rows = max(256, (rows // 256) * 256)
    return int(min(batch, rows))


def _vmem_limit_bytes(needed, vmem_cap):
    """Scoped-VMEM limit: cover the pipeline's needs, stay <= 3/4 of physical."""
    cap = max((vmem_cap * 3) // 4, 16 << 20)          # ~48 MiB on v7x, ~96 MiB v5e/v6e
    return int(min(max(needed + (4 << 20), 32 << 20), cap))


# ---------------------------------------------------------------------------
# Kernels
# ---------------------------------------------------------------------------
def _predict_kernel(x_ref, w_ref, b_ref, o_ref):
    # x_ref: (TB, D) VMEM, w_ref: (D, 1) VMEM (resident), b_ref: (1,) SMEM,
    # o_ref: (TB, 1).  MXU handles the (TB,D)@(D,1); kernel is HBM-bound.
    z = jnp.dot(x_ref[...], w_ref[...], preferred_element_type=jnp.float32)
    z = z + b_ref[0]
    o_ref[...] = (1.0 / (1.0 + jnp.exp(-z))).astype(o_ref.dtype)


def _loss_kernel(x_ref, w_ref, b_ref, y_ref, part_ref, *,
                 batch, tile_b, n_tiles, steps_per_slice, need_mask):
    # Grid: (n_par "parallel", steps "arbitrary").  part_ref: (1, TB, 1)
    # per-slice partial-sum accumulator, resident across the reduction axis.
    c = pl.program_id(0)
    i = pl.program_id(1)

    @pl.when(i == 0)
    def _init():
        part_ref[...] = jnp.zeros_like(part_ref)

    z = jnp.dot(x_ref[...], w_ref[...], preferred_element_type=jnp.float32)
    z = z + b_ref[0]
    y_pred = 1.0 / (1.0 + jnp.exp(-z))
    diff = y_pred - y_ref[...].astype(jnp.float32)
    sq = diff * diff                                   # (TB, 1)

    if need_mask:
        gt = c * steps_per_slice + i                   # global tile index
        rem = batch - (n_tiles - 1) * tile_b           # valid rows in ragged tile

        @pl.when(gt == n_tiles - 1)
        def _ragged():
            row = jax.lax.broadcasted_iota(jnp.int32, (tile_b, 1), 0)
            part_ref[...] = part_ref[...] + jnp.where(row < rem, sq, 0.0)[None]

        @pl.when(gt != n_tiles - 1)
        def _full():
            part_ref[...] = part_ref[...] + sq[None]
    else:
        part_ref[...] = part_ref[...] + sq[None]


# ---------------------------------------------------------------------------
# Wrappers (PyTorch nn.Linear parameter convention: w (1, D), b (1,))
# ---------------------------------------------------------------------------
def torch_model_predict(x, w, b, *, tile_b=None):
    """sigmoid(x @ w.T + b); x: (B, D), w: (1, D), b: (1,) -> (B, 1)"""
    B, D = x.shape
    vmem_cap = _tpu_vmem_capacity_bytes()
    tb = min(int(tile_b), B) if tile_b is not None else _pick_batch_tile(B, D, vmem_cap)
    grid = (pl.cdiv(B, tb),)

    needed = 2 * tb * D * 4 + 4 * tb * 4 + 2 * D * 4 + (1 << 20)
    out = pl.pallas_call(
        _predict_kernel,
        out_shape=jax.ShapeDtypeStruct((B, 1), jnp.float32),
        grid=grid,
        in_specs=[
            pl.BlockSpec((tb, D), lambda i: (i, 0)),             # x tile (pipelined)
            pl.BlockSpec((D, 1), lambda i: (0, 0)),              # weight, resident
            pl.BlockSpec(memory_space=pltpu.MemorySpace.SMEM),   # bias (1,) scalar
        ],
        out_specs=pl.BlockSpec((tb, 1), lambda i: (i, 0)),
        compiler_params=pltpu.CompilerParams(
            dimension_semantics=("parallel",),
            vmem_limit_bytes=_vmem_limit_bytes(needed, vmem_cap)),
    )(x, w.reshape(D, 1).astype(jnp.float32), b.reshape(1).astype(jnp.float32))
    return out


def torch_model_loss(x, w, b, y, *, tile_b=None):
    """mean((sigmoid(x @ w.T + b) - y)**2) -> scalar"""
    B, D = x.shape
    vmem_cap = _tpu_vmem_capacity_bytes()
    tb = min(int(tile_b), B) if tile_b is not None else _pick_batch_tile(B, D, vmem_cap)
    n_tiles = pl.cdiv(B, tb)
    n_par = 2 if (n_tiles >= 2 and n_tiles % 2 == 0) else 1   # 2 TCs on v7x
    steps = n_tiles // n_par
    need_mask = (B % tb) != 0

    kernel = functools.partial(
        _loss_kernel, batch=B, tile_b=tb, n_tiles=n_tiles,
        steps_per_slice=steps, need_mask=need_mask)

    needed = 2 * tb * D * 4 + 6 * tb * 4 + 2 * D * 4 + (1 << 20)
    partials = pl.pallas_call(
        kernel,
        out_shape=jax.ShapeDtypeStruct((n_par, tb, 1), jnp.float32),
        grid=(n_par, steps),
        in_specs=[
            pl.BlockSpec((tb, D), lambda c, i, s=steps: (c * s + i, 0)),   # x tile
            pl.BlockSpec((D, 1), lambda c, i: (0, 0)),                     # weight, resident
            pl.BlockSpec(memory_space=pltpu.MemorySpace.SMEM),             # bias (1,)
            pl.BlockSpec((tb, 1), lambda c, i, s=steps: (c * s + i, 0)),   # labels tile
        ],
        out_specs=pl.BlockSpec((1, tb, 1), lambda c, i: (c, 0, 0)),        # per-slice partials
        compiler_params=pltpu.CompilerParams(
            dimension_semantics=("parallel", "arbitrary"),
            vmem_limit_bytes=_vmem_limit_bytes(needed, vmem_cap)),
    )(x, w.reshape(D, 1).astype(jnp.float32), b.reshape(1).astype(jnp.float32), y)

    # Cross-slice reduce + divide by the true batch in the wrapper (tiny).
    return jnp.sum(partials) / B


def torch_model_forward(x, w, b, y=None, *, tile_b=None):
    """Mirrors TorchModel.forward: loss if y is given, else predictions."""
    if y is not None:
        return torch_model_loss(x, w, b, y, tile_b=tile_b)
    return torch_model_predict(x, w, b, tile_b=tile_b)


# ---------------------------------------------------------------------------
# Main
# ---------------------------------------------------------------------------
if __name__ == "__main__":
    batch = 256
    input_size = 64

    key = jax.random.PRNGKey(0)
    kx, kw, kb, ky = jax.random.split(key, 4)

    # nn.Linear(input_size, 1) parameter shapes: weight (1, D), bias (1,)
    x = jax.random.normal(kx, (batch, input_size), dtype=jnp.float32)
    w = jax.random.normal(kw, (1, input_size), dtype=jnp.float32) * 0.1
    b = jax.random.normal(kb, (1,), dtype=jnp.float32) * 0.1
    y = jax.random.uniform(ky, (batch, 1), dtype=jnp.float32)

    # Let the VMEM-budget picker choose the tile (single block at this scale).
    y_pred = torch_model_forward(x, w, b)            # no labels -> predictions
    loss = torch_model_forward(x, w, b, y)           # labels -> MSE loss
    jax.block_until_ready((y_pred, loss))

    ref_pred = jax.nn.sigmoid(x @ w.T + b)
    ref_loss = jnp.mean((ref_pred - y) ** 2)
    assert y_pred.shape == (batch, 1)
    assert jnp.allclose(y_pred, ref_pred, atol=1e-4, rtol=1e-4), "prediction mismatch"
    assert jnp.allclose(loss, ref_loss, atol=1e-4, rtol=1e-4), "loss mismatch"

    # Correctness check of the multi-tile / two-partial / ragged-tile paths
    # (explicit small tile only used for coverage, not as a benchmark setting).
    B2 = 200
    x2, y2 = x[:B2], y[:B2]
    y_pred2 = torch_model_forward(x2, w, b, tile_b=64)
    loss2 = torch_model_forward(x2, w, b, y2, tile_b=64)
    jax.block_until_ready((y_pred2, loss2))
    ref_pred2 = jax.nn.sigmoid(x2 @ w.T + b)
    ref_loss2 = jnp.mean((ref_pred2 - y2) ** 2)
    assert jnp.allclose(y_pred2, ref_pred2, atol=1e-4, rtol=1e-4), "tiled prediction mismatch"
    assert jnp.allclose(loss2, ref_loss2, atol=1e-4, rtol=1e-4), "tiled loss mismatch"

    print("KERNEL_OK")
</pallas_src>

<mosaic_0001>
module attributes {stable_mosaic.version = 11 : i64} {
  func.func @_predict_kernel(%arg0: i32, %arg1: memref<256x64xf32, #tpu.memory_space<vmem>>, %arg2: memref<64x1xf32, #tpu.memory_space<vmem>>, %arg3: memref<1xf32, #tpu.memory_space<smem>>, %arg4: memref<256x1xf32, #tpu.memory_space<vmem>>) attributes {dimension_semantics = [#tpu.dimension_semantics<parallel>], iteration_bounds = array<i64: 1>, scalar_prefetch = 0 : i64, scratch_operands = 0 : i64, tpu.core_type = #tpu.core_type<tc>, window_params = [{transform_indices = @transform_0, window_bounds = array<i64: 256, 64>}, {pipeline_mode = #tpu.pipeline_mode<synchronous>, transform_indices = @transform_1, window_bounds = array<i64: 64, 1>}, {transform_indices = @transform_2, window_bounds = array<i64: 1>}, {transform_indices = @transform_3, window_bounds = array<i64: 256, 1>}]} {
    %c0 = arith.constant 0 : index
    %c0_0 = arith.constant 0 : index
    %0 = vector.load %arg1[%c0, %c0_0] : memref<256x64xf32, #tpu.memory_space<vmem>>, vector<256x64xf32>
    %c0_1 = arith.constant 0 : index
    %c0_2 = arith.constant 0 : index
    %1 = vector.load %arg2[%c0_1, %c0_2] : memref<64x1xf32, #tpu.memory_space<vmem>>, vector<64x1xf32>
    %cst = arith.constant dense<0.000000e+00> : vector<256x1xf32>
    %2 = tpu.matmul %0, %1, %cst {dimension_numbers = #tpu.dot_dimension_numbers<[1], [0], [0], [1], [0, 0, 1, 1], [], []>} : vector<256x64xf32>, vector<64x1xf32>, vector<256x1xf32> -> vector<256x1xf32>
    %c0_3 = arith.constant 0 : index
    %3 = memref.load %arg3[%c0_3] : memref<1xf32, #tpu.memory_space<smem>>
    %4 = vector.broadcast %3 : f32 to vector<256x1xf32>
    %5 = arith.addf %2, %4 : vector<256x1xf32>
    %cst_4 = arith.constant 0.000000e+00 : f32
    %6 = vector.broadcast %cst_4 : f32 to vector<256x1xf32>
    %7 = arith.subf %6, %5 : vector<256x1xf32>
    %8 = math.exp %7 : vector<256x1xf32>
    %cst_5 = arith.constant 1.000000e+00 : f32
    %9 = vector.broadcast %cst_5 : f32 to vector<256x1xf32>
    %10 = arith.addf %9, %8 : vector<256x1xf32>
    %cst_6 = arith.constant 1.000000e+00 : f32
    %11 = vector.broadcast %cst_6 : f32 to vector<256x1xf32>
    %12 = arith.divf %11, %10 : vector<256x1xf32>
    %c0_7 = arith.constant 0 : index
    %c0_8 = arith.constant 0 : index
    %13 = vector.load %arg4[%c0_7, %c0_8] : memref<256x1xf32, #tpu.memory_space<vmem>>, vector<256x1xf32>
    tpu.vector_store %arg4[%c0_7, %c0_8], %12 {strides = array<i32>} : memref<256x1xf32, #tpu.memory_space<vmem>>, vector<256x1xf32>,
    return
  }
  func.func @transform_0(%arg0: i32) -> (i32, i32) {
    %c0_i32 = arith.constant 0 : i32
    %c0_i32_0 = arith.constant 0 : i32
    return %arg0, %c0_i32 : i32, i32
  }
  func.func @transform_1(%arg0: i32) -> (i32, i32) {
    %c0_i32 = arith.constant 0 : i32
    %c0_i32_0 = arith.constant 0 : i32
    %c0_i32_1 = arith.constant 0 : i32
    return %c0_i32, %c0_i32_0 : i32, i32
  }
  func.func @transform_2(%arg0: i32) -> i32 {
    %c0_i32 = arith.constant 0 : i32
    %c0_i32_0 = arith.constant 0 : i32
    return %c0_i32 : i32
  }
  func.func @transform_3(%arg0: i32) -> (i32, i32) {
    %c0_i32 = arith.constant 0 : i32
    %c0_i32_0 = arith.constant 0 : i32
    return %arg0, %c0_i32 : i32, i32
  }
}

</mosaic_0001>

<llo_original>
// kernel: tpu_custom_call.1
$region0: #{tpu_custom_call.1}
  #allocation0 [shape = 'u32[]', space=smem, size = 0x4, offset = 0x4, fixed_abs, tag = 'smem constant byte address 0x4 - core index']
  #allocation1 [shape = 'u32[144,128]{1,0:T(1,128)}', space=vmem, size = 0x12000, scoped, tag = 'internal scratch']
  #allocation2 [shape = 'f32[1]{0:T(128)S(6)}', space=smem, size = 0x200, scoped, tag = 'scoped memory for tpu_custom_call.1']
  %s0 = inlined_call_operand.vmem [shape: f32[256,64], index: 0, kind: input, shape index: {}]
  %s1 = inlined_call_operand.vmem [shape: f32[64,1], index: 1, kind: input, shape index: {}]
  %s2 = inlined_call_operand.<no memory space> [shape: f32[1], index: 2, kind: input, shape index: {}]
  %s3 = inlined_call_operand.vmem [shape: f32[256,1], index: 3, kind: output, shape index: {}]
  %s4 = sld [smem:[#allocation0]]
  $region22: #{tpu_custom_call.1} parent=0
    _
  %s6 = ssub.s32 1, %s4
  %s7 = scalar_select 0, %s6, %s4
  %8 = sst [smem:[#allocation2]] %s2
  // Predicated region
  $region2: #{tpu_custom_call.1} parent=0 // pred_check
    _
  $region3: #{tpu_custom_call.1} parent=0 // pred_check_branch
    %10 = sbr.rel (0) target = $region5
  $region4: #{tpu_custom_call.1} parent=0 // pred_region
    _
  $region5: #{tpu_custom_call.1} parent=0 // pred_fallthru
    _
  // Predicated region
  $region6: #{tpu_custom_call.1} parent=0 // pred_check
    _
  $region7: #{tpu_custom_call.1} parent=0 // pred_check_branch
    %12 = sbr.rel (0) target = $region9
  $region8: #{tpu_custom_call.1} parent=0 // pred_region
    _
  $region9: #{tpu_custom_call.1} parent=0 // pred_fallthru
    _
  // Predicated region
  $region10: #{tpu_custom_call.1} parent=0 // pred_check
    _
  $region11: #{tpu_custom_call.1} parent=0 // pred_check_branch
    %14 = sbr.rel (0) target = $region13
  $region12: #{tpu_custom_call.1} parent=0 // pred_region
    _
  $region13: #{tpu_custom_call.1} parent=0 // pred_fallthru
    _
  %v15 = vld [vmem:[%s0] sm:$0xff]
  %v16 = vld [vmem:[%s0 + $0x8] sm:$0xff]
  %v17 = vld [vmem:[%s0 + $0x10] sm:$0xff]
  %v18 = vld [vmem:[%s0 + $0x18] sm:$0xff]
  %v19 = vld [vmem:[%s0 + $0x20] sm:$0xff]
  %v20 = vld [vmem:[%s0 + $0x28] sm:$0xff]
  %v21 = vld [vmem:[%s0 + $0x30] sm:$0xff]
  %v22 = vld [vmem:[%s0 + $0x38] sm:$0xff]
  %v23 = vld [vmem:[%s0 + $0x40] sm:$0xff]
  %v24 = vld [vmem:[%s0 + $0x48] sm:$0xff]
  %v25 = vld [vmem:[%s0 + $0x50] sm:$0xff]
  %v26 = vld [vmem:[%s0 + $0x58] sm:$0xff]
  %v27 = vld [vmem:[%s0 + $0x60] sm:$0xff]
  %v28 = vld [vmem:[%s0 + $0x68] sm:$0xff]
  %v29 = vld [vmem:[%s0 + $0x70] sm:$0xff]
  %v30 = vld [vmem:[%s0 + $0x78] sm:$0xff]
  %v31 = vld [vmem:[%s0 + $0x80] sm:$0xff]
  %v32 = vld [vmem:[%s0 + $0x88] sm:$0xff]
  %v33 = vld [vmem:[%s0 + $0x90] sm:$0xff]
  %v34 = vld [vmem:[%s0 + $0x98] sm:$0xff]
  %v35 = vld [vmem:[%s0 + $0xa0] sm:$0xff]
  %v36 = vld [vmem:[%s0 + $0xa8] sm:$0xff]
  %v37 = vld [vmem:[%s0 + $0xb0] sm:$0xff]
  %v38 = vld [vmem:[%s0 + $0xb8] sm:$0xff]
  %v39 = vld [vmem:[%s0 + $0xc0] sm:$0xff]
  %v40 = vld [vmem:[%s0 + $0xc8] sm:$0xff]
  %v41 = vld [vmem:[%s0 + $0xd0] sm:$0xff]
  %v42 = vld [vmem:[%s0 + $0xd8] sm:$0xff]
  %v43 = vld [vmem:[%s0 + $0xe0] sm:$0xff]
  %v44 = vld [vmem:[%s0 + $0xe8] sm:$0xff]
  %v45 = vld [vmem:[%s0 + $0xf0] sm:$0xff]
  %v46 = vld [vmem:[%s0 + $0xf8] sm:$0xff]
  %v47 = vld [vmem:[%s1] sm:$0xff]
  %v48 = vld [vmem:[%s1 + $0x8] sm:$0xff]
  %v49 = vld [vmem:[%s1 + $0x10] sm:$0xff]
  %v50 = vld [vmem:[%s1 + $0x18] sm:$0xff]
  %v51 = vld [vmem:[%s1 + $0x20] sm:$0xff]
  %v52 = vld [vmem:[%s1 + $0x28] sm:$0xff]
  %v53 = vld [vmem:[%s1 + $0x30] sm:$0xff]
  %v54 = vld [vmem:[%s1 + $0x38] sm:$0xff]
  %s55 = sld [smem:[#allocation2]]
  %v56 = vstv %s55
  %vm57 = vcmask 523264
  %v59 = vsel %vm57, %v15, 0
  %v62 = vsel %vm57, %v16, 0
  %v65 = vsel %vm57, %v17, 0
  %v68 = vsel %vm57, %v18, 0
  %v71 = vsel %vm57, %v19, 0
  %v74 = vsel %vm57, %v20, 0
  %v77 = vsel %vm57, %v21, 0
  %v80 = vsel %vm57, %v22, 0
  %v83 = vsel %vm57, %v23, 0
  %v86 = vsel %vm57, %v24, 0
  %v89 = vsel %vm57, %v25, 0
  %v92 = vsel %vm57, %v26, 0
  %v95 = vsel %vm57, %v27, 0
  %v98 = vsel %vm57, %v28, 0
  %v101 = vsel %vm57, %v29, 0
  %v104 = vsel %vm57, %v30, 0
  %v107 = vsel %vm57, %v31, 0
  %v110 = vsel %vm57, %v32, 0
  %v113 = vsel %vm57, %v33, 0
  %v116 = vsel %vm57, %v34, 0
  %v119 = vsel %vm57, %v35, 0
  %v122 = vsel %vm57, %v36, 0
  %v125 = vsel %vm57, %v37, 0
  %v128 = vsel %vm57, %v38, 0
  %v131 = vsel %vm57, %v39, 0
  %v134 = vsel %vm57, %v40, 0
  %v137 = vsel %vm57, %v41, 0
  %v140 = vsel %vm57, %v42, 0
  %v143 = vsel %vm57, %v43, 0
  %v146 = vsel %vm57, %v44, 0
  %v149 = vsel %vm57, %v45, 0
  %v152 = vsel %vm57, %v46, 0
  %154 = vmatprep.subr.mxu0 0.0
  %155 = vmatpush1.msra.mxu0 0.0
  %156 = vmatprep.subr.mxu0 0.0
  %157 = vmatpush1.msra.mxu0 0.0
  %158 = vmatprep.subr.mxu0 0.0
  %159 = vmatpush1.msra.mxu0 0.0
  %160 = vmatprep.subr.mxu0 0.0
  %161 = vmatpush1.msra.mxu0 0.0
  %162 = vmatprep.subr.mxu0 0.0
  %163 = vmatpush1.msra.mxu0 0.0
  %164 = vmatprep.subr.mxu0 0.0
  %165 = vmatpush1.msra.mxu0 0.0
  %166 = vmatprep.subr.mxu0 0.0
  %167 = vmatpush1.msra.mxu0 0.0
  %168 = vmatprep.subr.mxu0 0.0
  %169 = vmatpush1.msra.mxu0 0.0
  %170 = vmatprep.subr.mxu0 0.0
  %171 = vmatpush1.msra.mxu0 %v54
  %172 = vmatprep.subr.mxu0 0.0
  %173 = vmatpush1.msra.mxu0 %v53
  %174 = vmatprep.subr.mxu0 0.0
  %175 = vmatpush1.msra.mxu0 %v52
  %176 = vmatprep.subr.mxu0 0.0
  %177 = vmatpush1.msra.mxu0 %v51
  %178 = vmatprep.subr.mxu0 0.0
  %179 = vmatpush1.msra.mxu0 %v50
  %180 = vmatprep.subr.mxu0 0.0
  %181 = vmatpush1.msra.mxu0 %v49
  %182 = vmatprep.subr.mxu0 0.0
  %183 = vmatpush1.msra.mxu0 %v48
  %184 = vmatprep.subr.mxu0 0.0
  %185 = vmatpush1.msra.mxu0 %v47
  %186 = vmatprep.subr.mxu0 0.0
  %187 = vmatpush2.msra.mxu0 0.0
  %188 = vmatprep.subr.mxu0 0.0
  %189 = vmatpush2.msra.mxu0 0.0
  %190 = vmatprep.subr.mxu0 0.0
  %191 = vmatpush2.msra.mxu0 0.0
  %192 = vmatprep.subr.mxu0 0.0
  %193 = vmatpush2.msra.mxu0 0.0
  %194 = vmatprep.subr.mxu0 0.0
  %195 = vmatpush2.msra.mxu0 0.0
  %196 = vmatprep.subr.mxu0 0.0
  %197 = vmatpush2.msra.mxu0 0.0
  %198 = vmatprep.subr.mxu0 0.0
  %199 = vmatpush2.msra.mxu0 0.0
  %200 = vmatprep.subr.mxu0 0.0
  %201 = vmatpush2.msra.mxu0 0.0
  %202 = vmatprep.subr.mxu0 0.0
  %203 = vmatpush2.msra.mxu0 0.0
  %204 = vmatprep.subr.mxu0 0.0
  %205 = vmatpush2.msra.mxu0 0.0
  %206 = vmatprep.subr.mxu0 0.0
  %207 = vmatpush2.msra.mxu0 0.0
  %208 = vmatprep.subr.mxu0 0.0
  %209 = vmatpush2.msra.mxu0 0.0
  %210 = vmatprep.subr.mxu0 0.0
  %211 = vmatpush2.msra.mxu0 0.0
  %212 = vmatprep.subr.mxu0 0.0
  %213 = vmatpush2.msra.mxu0 0.0
  %214 = vmatprep.subr.mxu0 0.0
  %215 = vmatpush2.msra.mxu0 0.0
  %216 = vmatprep.subr.mxu0 0.0
  %217 = vmatpush2.msra.mxu0 0.0
  %218 = vmatprep.mubr.f32.mxu0 0.0
  %219 = vmatmul.mubr.f32.gmra.mxu0 %v59
  %v220 = vpop.f32.mrf.mxu0
  %v221 = vadd.f32 %v56, %v220
  %v222 = vpop.f32.mrf.mxu0
  %223 = vmatprep.mubr.f32.mxu0 0.0
  %224 = vmatmul.mubr.f32.gmra.mxu0 %v62
  %v225 = vpop.f32.mrf.mxu0
  %v226 = vadd.f32 %v56, %v225
  %v227 = vpop.f32.mrf.mxu0
  %228 = vmatprep.mubr.f32.mxu0 0.0
  %229 = vmatmul.mubr.f32.gmra.mxu0 %v65
  %v230 = vpop.f32.mrf.mxu0
  %v231 = vadd.f32 %v56, %v230
  %v232 = vpop.f32.mrf.mxu0
  %233 = vmatprep.mubr.f32.mxu0 0.0
  %234 = vmatmul.mubr.f32.gmra.mxu0 %v68
  %v235 = vpop.f32.mrf.mxu0
  %v236 = vadd.f32 %v56, %v235
  %v237 = vpop.f32.mrf.mxu0
  %238 = vmatprep.mubr.f32.mxu0 0.0
  %239 = vmatmul.mubr.f32.gmra.mxu0 %v71
  %v240 = vpop.f32.mrf.mxu0
  %v241 = vadd.f32 %v56, %v240
  %v242 = vpop.f32.mrf.mxu0
  %243 = vmatprep.mubr.f32.mxu0 0.0
  %244 = vmatmul.mubr.f32.gmra.mxu0 %v74
  %v245 = vpop.f32.mrf.mxu0
  %v246 = vadd.f32 %v56, %v245
  %v247 = vpop.f32.mrf.mxu0
  %248 = vmatprep.mubr.f32.mxu0 0.0
  %249 = vmatmul.mubr.f32.gmra.mxu0 %v77
  %v250 = vpop.f32.mrf.mxu0
  %v251 = vadd.f32 %v56, %v250
  %v252 = vpop.f32.mrf.mxu0
  %253 = vmatprep.mubr.f32.mxu0 0.0
  %254 = vmatmul.mubr.f32.gmra.mxu0 %v80
  %v255 = vpop.f32.mrf.mxu0
  %v256 = vadd.f32 %v56, %v255
  %v257 = vpop.f32.mrf.mxu0
  %258 = vmatprep.mubr.f32.mxu0 0.0
  %259 = vmatmul.mubr.f32.gmra.mxu0 %v83
  %v260 = vpop.f32.mrf.mxu0
  %v261 = vadd.f32 %v56, %v260
  %v262 = vpop.f32.mrf.mxu0
  %263 = vmatprep.mubr.f32.mxu0 0.0
  %264 = vmatmul.mubr.f32.gmra.mxu0 %v86
  %v265 = vpop.f32.mrf.mxu0
  %v266 = vadd.f32 %v56, %v265
  %v267 = vpop.f32.mrf.mxu0
  %268 = vmatprep.mubr.f32.mxu0 0.0
  %269 = vmatmul.mubr.f32.gmra.mxu0 %v89
  %v270 = vpop.f32.mrf.mxu0
  %v271 = vadd.f32 %v56, %v270
  %v272 = vpop.f32.mrf.mxu0
  %273 = vmatprep.mubr.f32.mxu0 0.0
  %274 = vmatmul.mubr.f32.gmra.mxu0 %v92
  %v275 = vpop.f32.mrf.mxu0
  %v276 = vadd.f32 %v56, %v275
  %v277 = vpop.f32.mrf.mxu0
  %278 = vmatprep.mubr.f32.mxu0 0.0
  %279 = vmatmul.mubr.f32.gmra.mxu0 %v95
  %v280 = vpop.f32.mrf.mxu0
  %v281 = vadd.f32 %v56, %v280
  %v282 = vpop.f32.mrf.mxu0
  %283 = vmatprep.mubr.f32.mxu0 0.0
  %284 = vmatmul.mubr.f32.gmra.mxu0 %v98
  %v285 = vpop.f32.mrf.mxu0
  %v286 = vadd.f32 %v56, %v285
  %v287 = vpop.f32.mrf.mxu0
  %288 = vmatprep.mubr.f32.mxu0 0.0
  %289 = vmatmul.mubr.f32.gmra.mxu0 %v101
  %v290 = vpop.f32.mrf.mxu0
  %v291 = vadd.f32 %v56, %v290
  %v292 = vpop.f32.mrf.mxu0
  %293 = vmatprep.mubr.f32.mxu0 0.0
  %294 = vmatmul.mubr.f32.gmra.mxu0 %v104
  %v295 = vpop.f32.mrf.mxu0
  %v296 = vadd.f32 %v56, %v295
  %v297 = vpop.f32.mrf.mxu0
  %298 = vmatprep.mubr.f32.mxu0 0.0
  %299 = vmatmul.mubr.f32.gmra.mxu0 %v107
  %v300 = vpop.f32.mrf.mxu0
  %v301 = vadd.f32 %v56, %v300
  %v302 = vpop.f32.mrf.mxu0
  %303 = vmatprep.mubr.f32.mxu0 0.0
  %304 = vmatmul.mubr.f32.gmra.mxu0 %v110
  %v305 = vpop.f32.mrf.mxu0
  %v306 = vadd.f32 %v56, %v305
  %v307 = vpop.f32.mrf.mxu0
  %308 = vmatprep.mubr.f32.mxu0 0.0
  %309 = vmatmul.mubr.f32.gmra.mxu0 %v113
  %v310 = vpop.f32.mrf.mxu0
  %v311 = vadd.f32 %v56, %v310
  %v312 = vpop.f32.mrf.mxu0
  %313 = vmatprep.mubr.f32.mxu0 0.0
  %314 = vmatmul.mubr.f32.gmra.mxu0 %v116
  %v315 = vpop.f32.mrf.mxu0
  %v316 = vadd.f32 %v56, %v315
  %v317 = vpop.f32.mrf.mxu0
  %318 = vmatprep.mubr.f32.mxu0 0.0
  %319 = vmatmul.mubr.f32.gmra.mxu0 %v119
  %v320 = vpop.f32.mrf.mxu0
  %v321 = vadd.f32 %v56, %v320
  %v322 = vpop.f32.mrf.mxu0
  %323 = vmatprep.mubr.f32.mxu0 0.0
  %324 = vmatmul.mubr.f32.gmra.mxu0 %v122
  %v325 = vpop.f32.mrf.mxu0
  %v326 = vadd.f32 %v56, %v325
  %v327 = vpop.f32.mrf.mxu0
  %328 = vmatprep.mubr.f32.mxu0 0.0
  %329 = vmatmul.mubr.f32.gmra.mxu0 %v125
  %v330 = vpop.f32.mrf.mxu0
  %v331 = vadd.f32 %v56, %v330
  %v332 = vpop.f32.mrf.mxu0
  %333 = vmatprep.mubr.f32.mxu0 0.0
  %334 = vmatmul.mubr.f32.gmra.mxu0 %v128
  %v335 = vpop.f32.mrf.mxu0
  %v336 = vadd.f32 %v56, %v335
  %v337 = vpop.f32.mrf.mxu0
  %338 = vmatprep.mubr.f32.mxu0 0.0
  %339 = vmatmul.mubr.f32.gmra.mxu0 %v131
  %v340 = vpop.f32.mrf.mxu0
  %v341 = vadd.f32 %v56, %v340
  %v342 = vpop.f32.mrf.mxu0
  %343 = vmatprep.mubr.f32.mxu0 0.0
  %344 = vmatmul.mubr.f32.gmra.mxu0 %v134
  %v345 = vpop.f32.mrf.mxu0
  %v346 = vadd.f32 %v56, %v345
  %v347 = vpop.f32.mrf.mxu0
  %348 = vmatprep.mubr.f32.mxu0 0.0
  %349 = vmatmul.mubr.f32.gmra.mxu0 %v137
  %v350 = vpop.f32.mrf.mxu0
  %v351 = vadd.f32 %v56, %v350
  %v352 = vpop.f32.mrf.mxu0
  %353 = vmatprep.mubr.f32.mxu0 0.0
  %354 = vmatmul.mubr.f32.gmra.mxu0 %v140
  %v355 = vpop.f32.mrf.mxu0
  %v356 = vadd.f32 %v56, %v355
  %v357 = vpop.f32.mrf.mxu0
  %358 = vmatprep.mubr.f32.mxu0 0.0
  %359 = vmatmul.mubr.f32.gmra.mxu0 %v143
  %v360 = vpop.f32.mrf.mxu0
  %v361 = vadd.f32 %v56, %v360
  %v362 = vpop.f32.mrf.mxu0
  %363 = vmatprep.mubr.f32.mxu0 0.0
  %364 = vmatmul.mubr.f32.gmra.mxu0 %v146
  %v365 = vpop.f32.mrf.mxu0
  %v366 = vadd.f32 %v56, %v365
  %v367 = vpop.f32.mrf.mxu0
  %368 = vmatprep.mubr.f32.mxu0 0.0
  %369 = vmatmul.mubr.f32.gmra.mxu0 %v149
  %v370 = vpop.f32.mrf.mxu0
  %v371 = vadd.f32 %v56, %v370
  %v372 = vpop.f32.mrf.mxu0
  %373 = vmatprep.mubr.f32.mxu0 0.0
  %374 = vmatmul.mubr.f32.gmra.mxu0 %v152
  %v375 = vpop.f32.mrf.mxu0
  %v376 = vadd.f32 %v56, %v375
  %v377 = vpop.f32.mrf.mxu0
  %378 = vdwg.mxu0
  %v379 = vsub.f32 0.0, %v221
  %v380 = vsub.f32 0.0, %v226
  %v381 = vsub.f32 0.0, %v231
  %v382 = vsub.f32 0.0, %v236
  %v383 = vsub.f32 0.0, %v241
  %v384 = vsub.f32 0.0, %v246
  %v385 = vsub.f32 0.0, %v251
  %v386 = vsub.f32 0.0, %v256
  %v387 = vsub.f32 0.0, %v261
  %v388 = vsub.f32 0.0, %v266
  %v389 = vsub.f32 0.0, %v271
  %v390 = vsub.f32 0.0, %v276
  %v391 = vsub.f32 0.0, %v281
  %v392 = vsub.f32 0.0, %v286
  %v393 = vsub.f32 0.0, %v291
  %v394 = vsub.f32 0.0, %v296
  %v395 = vsub.f32 0.0, %v301
  %v396 = vsub.f32 0.0, %v306
  %v397 = vsub.f32 0.0, %v311
  %v398 = vsub.f32 0.0, %v316
  %v399 = vsub.f32 0.0, %v321
  %v400 = vsub.f32 0.0, %v326
  %v401 = vsub.f32 0.0, %v331
  %v402 = vsub.f32 0.0, %v336
  %v403 = vsub.f32 0.0, %v341
  %v404 = vsub.f32 0.0, %v346
  %v405 = vsub.f32 0.0, %v351
  %v406 = vsub.f32 0.0, %v356
  %v407 = vsub.f32 0.0, %v361
  %v408 = vsub.f32 0.0, %v366
  %v409 = vsub.f32 0.0, %v371
  %v410 = vsub.f32 0.0, %v376
  %v411 = vmul.f32 %v379, 1.442695
  %v412 = vpow.pop %v411
  %v413 = vmul.f32 %v380, 1.442695
  %v414 = vpow.pop %v413
  %v415 = vmul.f32 %v381, 1.442695
  %v416 = vpow.pop %v415
  %v417 = vmul.f32 %v382, 1.442695
  %v418 = vpow.pop %v417
  %v419 = vmul.f32 %v383, 1.442695
  %v420 = vpow.pop %v419
  %v421 = vmul.f32 %v384, 1.442695
  %v422 = vpow.pop %v421
  %v423 = vmul.f32 %v385, 1.442695
  %v424 = vpow.pop %v423
  %v425 = vmul.f32 %v386, 1.442695
  %v426 = vpow.pop %v425
  %v427 = vmul.f32 %v387, 1.442695
  %v428 = vpow.pop %v427
  %v429 = vmul.f32 %v388, 1.442695
  %v430 = vpow.pop %v429
  %v431 = vmul.f32 %v389, 1.442695
  %v432 = vpow.pop %v431
  %v433 = vmul.f32 %v390, 1.442695
  %v434 = vpow.pop %v433
  %v435 = vmul.f32 %v391, 1.442695
  %v436 = vpow.pop %v435
  %v437 = vmul.f32 %v392, 1.442695
  %v438 = vpow.pop %v437
  %v439 = vmul.f32 %v393, 1.442695
  %v440 = vpow.pop %v439
  %v441 = vmul.f32 %v394, 1.442695
  %v442 = vpow.pop %v441
  %v443 = vmul.f32 %v395, 1.442695
  %v444 = vpow.pop %v443
  %v445 = vmul.f32 %v396, 1.442695
  %v446 = vpow.pop %v445
  %v447 = vmul.f32 %v397, 1.442695
  %v448 = vpow.pop %v447
  %v449 = vmul.f32 %v398, 1.442695
  %v450 = vpow.pop %v449
  %v451 = vmul.f32 %v399, 1.442695
  %v452 = vpow.pop %v451
  %v453 = vmul.f32 %v400, 1.442695
  %v454 = vpow.pop %v453
  %v455 = vmul.f32 %v401, 1.442695
  %v456 = vpow.pop %v455
  %v457 = vmul.f32 %v402, 1.442695
  %v458 = vpow.pop %v457
  %v459 = vmul.f32 %v403, 1.442695
  %v460 = vpow.pop %v459
  %v461 = vmul.f32 %v404, 1.442695
  %v462 = vpow.pop %v461
  %v463 = vmul.f32 %v405, 1.442695
  %v464 = vpow.pop %v463
  %v465 = vmul.f32 %v406, 1.442695
  %v466 = vpow.pop %v465
  %v467 = vmul.f32 %v407, 1.442695
  %v468 = vpow.pop %v467
  %v469 = vmul.f32 %v408, 1.442695
  %v470 = vpow.pop %v469
  %v471 = vmul.f32 %v409, 1.442695
  %v472 = vpow.pop %v471
  %v473 = vmul.f32 %v410, 1.442695
  %v474 = vpow.pop %v473
  %v475 = vadd.f32 %v412, 1.0
  %v476 = vadd.f32 %v414, 1.0
  %v477 = vadd.f32 %v416, 1.0
  %v478 = vadd.f32 %v418, 1.0
  %v479 = vadd.f32 %v420, 1.0
  %v480 = vadd.f32 %v422, 1.0
  %v481 = vadd.f32 %v424, 1.0
  %v482 = vadd.f32 %v426, 1.0
  %v483 = vadd.f32 %v428, 1.0
  %v484 = vadd.f32 %v430, 1.0
  %v485 = vadd.f32 %v432, 1.0
  %v486 = vadd.f32 %v434, 1.0
  %v487 = vadd.f32 %v436, 1.0
  %v488 = vadd.f32 %v438, 1.0
  %v489 = vadd.f32 %v440, 1.0
  %v490 = vadd.f32 %v442, 1.0
  %v491 = vadd.f32 %v444, 1.0
  %v492 = vadd.f32 %v446, 1.0
  %v493 = vadd.f32 %v448, 1.0
  %v494 = vadd.f32 %v450, 1.0
  %v495 = vadd.f32 %v452, 1.0
  %v496 = vadd.f32 %v454, 1.0
  %v497 = vadd.f32 %v456, 1.0
  %v498 = vadd.f32 %v458, 1.0
  %v499 = vadd.f32 %v460, 1.0
  %v500 = vadd.f32 %v462, 1.0
  %v501 = vadd.f32 %v464, 1.0
  %v502 = vadd.f32 %v466, 1.0
  %v503 = vadd.f32 %v468, 1.0
  %v504 = vadd.f32 %v470, 1.0
  %v505 = vadd.f32 %v472, 1.0
  %v506 = vadd.f32 %v474, 1.0
  %v507 = vrcp.pop %v475
  %v508 = vmul.f32 1.0, %v507
  %v509 = vrcp.pop %v476
  %v510 = vmul.f32 1.0, %v509
  %v511 = vrcp.pop %v477
  %v512 = vmul.f32 1.0, %v511
  %v513 = vrcp.pop %v478
  %v514 = vmul.f32 1.0, %v513
  %v515 = vrcp.pop %v479
  %v516 = vmul.f32 1.0, %v515
  %v517 = vrcp.pop %v480
  %v518 = vmul.f32 1.0, %v517
  %v519 = vrcp.pop %v481
  %v520 = vmul.f32 1.0, %v519
  %v521 = vrcp.pop %v482
  %v522 = vmul.f32 1.0, %v521
  %v523 = vrcp.pop %v483
  %v524 = vmul.f32 1.0, %v523
  %v525 = vrcp.pop %v484
  %v526 = vmul.f32 1.0, %v525
  %v527 = vrcp.pop %v485
  %v528 = vmul.f32 1.0, %v527
  %v529 = vrcp.pop %v486
  %v530 = vmul.f32 1.0, %v529
  %v531 = vrcp.pop %v487
  %v532 = vmul.f32 1.0, %v531
  %v533 = vrcp.pop %v488
  %v534 = vmul.f32 1.0, %v533
  %v535 = vrcp.pop %v489
  %v536 = vmul.f32 1.0, %v535
  %v537 = vrcp.pop %v490
  %v538 = vmul.f32 1.0, %v537
  %v539 = vrcp.pop %v491
  %v540 = vmul.f32 1.0, %v539
  %v541 = vrcp.pop %v492
  %v542 = vmul.f32 1.0, %v541
  %v543 = vrcp.pop %v493
  %v544 = vmul.f32 1.0, %v543
  %v545 = vrcp.pop %v494
  %v546 = vmul.f32 1.0, %v545
  %v547 = vrcp.pop %v495
  %v548 = vmul.f32 1.0, %v547
  %v549 = vrcp.pop %v496
  %v550 = vmul.f32 1.0, %v549
  %v551 = vrcp.pop %v497
  %v552 = vmul.f32 1.0, %v551
  %v553 = vrcp.pop %v498
  %v554 = vmul.f32 1.0, %v553
  %v555 = vrcp.pop %v499
  %v556 = vmul.f32 1.0, %v555
  %v557 = vrcp.pop %v500
  %v558 = vmul.f32 1.0, %v557
  %v559 = vrcp.pop %v501
  %v560 = vmul.f32 1.0, %v559
  %v561 = vrcp.pop %v502
  %v562 = vmul.f32 1.0, %v561
  %v563 = vrcp.pop %v503
  %v564 = vmul.f32 1.0, %v563
  %v565 = vrcp.pop %v504
  %v566 = vmul.f32 1.0, %v565
  %v567 = vrcp.pop %v505
  %v568 = vmul.f32 1.0, %v567
  %v569 = vrcp.pop %v506
  %v570 = vmul.f32 1.0, %v569
  %vm571 = vcmask 7168
  %572 = vst.msk [vmem:[%s3] sm:$0xff] %vm571, %v508
  %573 = vst.msk [vmem:[%s3 + $0x8] sm:$0xff] %vm571, %v510
  %574 = vst.msk [vmem:[%s3 + $0x10] sm:$0xff] %vm571, %v512
  %575 = vst.msk [vmem:[%s3 + $0x18] sm:$0xff] %vm571, %v514
  %576 = vst.msk [vmem:[%s3 + $0x20] sm:$0xff] %vm571, %v516
  %577 = vst.msk [vmem:[%s3 + $0x28] sm:$0xff] %vm571, %v518
  %578 = vst.msk [vmem:[%s3 + $0x30] sm:$0xff] %vm571, %v520
  %579 = vst.msk [vmem:[%s3 + $0x38] sm:$0xff] %vm571, %v522
  %580 = vst.msk [vmem:[%s3 + $0x40] sm:$0xff] %vm571, %v524
  %581 = vst.msk [vmem:[%s3 + $0x48] sm:$0xff] %vm571, %v526
  %582 = vst.msk [vmem:[%s3 + $0x50] sm:$0xff] %vm571, %v528
  %583 = vst.msk [vmem:[%s3 + $0x58] sm:$0xff] %vm571, %v530
  %584 = vst.msk [vmem:[%s3 + $0x60] sm:$0xff] %vm571, %v532
  %585 = vst.msk [vmem:[%s3 + $0x68] sm:$0xff] %vm571, %v534
  %586 = vst.msk [vmem:[%s3 + $0x70] sm:$0xff] %vm571, %v536
  %587 = vst.msk [vmem:[%s3 + $0x78] sm:$0xff] %vm571, %v538
  %588 = vst.msk [vmem:[%s3 + $0x80] sm:$0xff] %vm571, %v540
  %589 = vst.msk [vmem:[%s3 + $0x88] sm:$0xff] %vm571, %v542
  %590 = vst.msk [vmem:[%s3 + $0x90] sm:$0xff] %vm571, %v544
  %591 = vst.msk [vmem:[%s3 + $0x98] sm:$0xff] %vm571, %v546
  %592 = vst.msk [vmem:[%s3 + $0xa0] sm:$0xff] %vm571, %v548
  %593 = vst.msk [vmem:[%s3 + $0xa8] sm:$0xff] %vm571, %v550
  %594 = vst.msk [vmem:[%s3 + $0xb0] sm:$0xff] %vm571, %v552
  %595 = vst.msk [vmem:[%s3 + $0xb8] sm:$0xff] %vm571, %v554
  %596 = vst.msk [vmem:[%s3 + $0xc0] sm:$0xff] %vm571, %v556
  %597 = vst.msk [vmem:[%s3 + $0xc8] sm:$0xff] %vm571, %v558
  %598 = vst.msk [vmem:[%s3 + $0xd0] sm:$0xff] %vm571, %v560
  %599 = vst.msk [vmem:[%s3 + $0xd8] sm:$0xff] %vm571, %v562
  %600 = vst.msk [vmem:[%s3 + $0xe0] sm:$0xff] %vm571, %v564
  %601 = vst.msk [vmem:[%s3 + $0xe8] sm:$0xff] %vm571, %v566
  %602 = vst.msk [vmem:[%s3 + $0xf0] sm:$0xff] %vm571, %v568
  %603 = vst.msk [vmem:[%s3 + $0xf8] sm:$0xff] %vm571, %v570
  // Predicated region
  $region14: #{tpu_custom_call.1} parent=0 // pred_check
    _
  $region15: #{tpu_custom_call.1} parent=0 // pred_check_branch
    %605 = sbr.rel (0) target = $region17
  $region16: #{tpu_custom_call.1} parent=0 // pred_region
    _
  $region17: #{tpu_custom_call.1} parent=0 // pred_fallthru
    _
  // Predicated region
  $region18: #{tpu_custom_call.1} parent=0 // pred_check
    _
  $region19: #{tpu_custom_call.1} parent=0 // pred_check_branch
    %607 = sbr.rel (0) target = $region21
  $region20: #{tpu_custom_call.1} parent=0 // pred_region
    _
  $region21: #{tpu_custom_call.1} parent=0 // pred_fallthru
    _

</llo_original>
